<compile_context>
chip_gen: v5e
topology: v5e:2x2
jax: 0.10.0
libtpu: 0.0.40
codegen_flags: <defaults>
</compile_context>

<pallas_src>
import math

import jax
import jax.numpy as jnp
from jax.experimental import pallas as pl
from jax.experimental.pallas import tpu as pltpu


def _round_up(x, m):
    return ((x + m - 1) // m) * m


def _dot_nt(w, x):
    """w: (O, K), x: (B, K) -> (O, B) == w @ x.T with f32 MXU accumulation."""
    return jax.lax.dot_general(
        w, x, dimension_numbers=(((1,), (1,)), ((), ())),
        preferred_element_type=jnp.float32)


def critic_kernel(x_ref, a_ref,
                  w1_ref, b1_ref,
                  w2s_ref, w2a_ref, b2_ref,
                  w3_ref, b3_ref,
                  out_ref):
    # layer 1: xs = relu(W1 @ X^T + b1)                    (H, TILE_B)
    xs = _dot_nt(w1_ref[...], x_ref[...]) + b1_ref[...]          # f32
    xs = jnp.maximum(xs, 0.0).astype(w2s_ref.dtype)

    # layer 2: h = relu(W2s @ xs + W2a @ A^T + b2)         (H, TILE_B)
    h = (jnp.dot(w2s_ref[...], xs, preferred_element_type=jnp.float32)
         + _dot_nt(w2a_ref[...], a_ref[...])
         + b2_ref[...])                                          # f32
    h = jnp.maximum(h, 0.0).astype(w3_ref.dtype)

    # layer 3: out = W3 @ h + b3                           (1, TILE_B) lane-dense
    out = jnp.dot(w3_ref[...], h, preferred_element_type=jnp.float32) + b3_ref[0, 0]
    out_ref[...] = out.astype(out_ref.dtype)


def _pick_tile_b(b_pad128, requested):
    """Largest multiple-of-128 tile that divides the padded batch, capped by
    `requested`, keeping >= 2 grid steps when the batch allows (v7x 2 TCs)."""
    n_blocks = b_pad128 // 128
    d_cap = max(1, min(requested // 128, n_blocks))
    if n_blocks >= 2:
        d_cap = max(1, min(d_cap, n_blocks // 2))
    best = 1
    for d in range(1, d_cap + 1):
        if n_blocks % d == 0:
            best = d
    return best * 128


def _vmem_tile_bytes(shape, dtype):
    """VMEM footprint of one buffered tile, accounting for lane/sublane padding."""
    itemsize = jnp.dtype(dtype).itemsize
    packing = max(1, 4 // itemsize)
    shape = tuple(int(d) for d in shape)
    if len(shape) == 1:
        shape = (1,) + shape
    lead = 1
    for d in shape[:-2]:
        lead *= d
    sub = _round_up(shape[-2], 8 * packing)
    lane = _round_up(shape[-1], 128)
    return lead * sub * lane * itemsize


def critic_forward(state, action, params, *, tile_b=2048,
                   compute_dtype=jnp.float32):
    """state: (B, S), action: (B, A) -> (B, 1) float32."""
    w1, b1, w2s, w2a, b2, w3, b3 = params
    B, S = state.shape
    A = action.shape[1]

    # bf16 MXU path (v6e/v7x): cast streamed inputs + weights only; biases,
    # accumulation and all VPU (bias+relu) work stay in f32.
    w1, w2s, w2a, w3 = (w.astype(compute_dtype) for w in (w1, w2s, w2a, w3))
    x = state.astype(compute_dtype)
    a = action.astype(compute_dtype)

    # Pad the batch only to the 128-lane boundary (no wrapper transpose).
    b_pad = _round_up(B, 128)
    tile_b = _pick_tile_b(b_pad, max(128, int(tile_b)))
    grid = (b_pad // tile_b,)
    if b_pad != B:
        x = jnp.pad(x, ((0, b_pad - B), (0, 0)))
        a = jnp.pad(a, ((0, b_pad - B), (0, 0)))

    def tiled_spec(cols):
        # batch-tiled operand: tile along the batch (sublane) axis
        return pl.BlockSpec((tile_b, cols), lambda i: (i, 0))

    def resident_spec(arr):
        # weights/biases: constant block index -> DMA'd once, VMEM-resident
        return pl.BlockSpec(arr.shape, lambda i: (0, 0))

    in_specs = [
        tiled_spec(S),                 # state  (batch-major)
        tiled_spec(A),                 # action (batch-major)
        resident_spec(w1), resident_spec(b1),
        resident_spec(w2s), resident_spec(w2a), resident_spec(b2),
        resident_spec(w3),
        pl.BlockSpec(memory_space=pltpu.MemorySpace.SMEM),   # b3 scalar
    ]

    # vmem_limit from actual double-buffered tile footprints (b3 is in SMEM).
    vmem_operands = [
        ((tile_b, S), x.dtype), ((tile_b, A), a.dtype),
        (w1.shape, w1.dtype), (b1.shape, b1.dtype),
        (w2s.shape, w2s.dtype), (w2a.shape, w2a.dtype), (b2.shape, b2.dtype),
        (w3.shape, w3.dtype),
        ((1, tile_b), jnp.float32),    # output tile
    ]
    needed = 2 * sum(_vmem_tile_bytes(s, d) for s, d in vmem_operands)
    try:
        cap = int(getattr(pltpu.get_tpu_info(), "vmem_capacity_bytes",
                          64 * 1024 * 1024)) * 3 // 4
    except Exception:
        cap = 48 * 1024 * 1024
    vmem_limit = int(min(cap, max(needed + (4 << 20), 32 << 20)))

    out_t = pl.pallas_call(
        critic_kernel,
        out_shape=jax.ShapeDtypeStruct((1, b_pad), jnp.float32),
        grid=grid,
        in_specs=in_specs,
        out_specs=pl.BlockSpec((1, tile_b), lambda i: (0, i)),
        compiler_params=pltpu.CompilerParams(
            dimension_semantics=("parallel",),
            vmem_limit_bytes=vmem_limit,
        ),
    )(x, a, w1, b1, w2s, w2a, b2, w3, b3)

    # (1, b_pad) -> (B, 1), dropping padded batch columns
    return out_t[0, :B, None]


critic_forward_jit = jax.jit(
    critic_forward, static_argnames=("tile_b", "compute_dtype"))


def init_critic_params(key, state_size, action_size, hidden_size, *,
                       hidden_pad_multiple=128):
    """Init mirroring the PyTorch module's reset_parameters().

    PyTorch weight shape is (out, in); hidden_init uses fan_in = weight.size(0)
    (== out_features) -> lim = 1/sqrt(hidden_size) for linear1/linear2.
    Biases keep nn.Linear's default U(-1/sqrt(in_features), 1/sqrt(in_features)).
    W2 is split into its state-hidden part and action part; the hidden dim is
    zero-padded to an MXU-aligned multiple (exact no-op through relu / zero W3
    columns); biases are (H, 1) columns for feature-major broadcast.
    """
    k = jax.random.split(key, 6)
    H, S, A = hidden_size, state_size, action_size
    f32 = jnp.float32

    lim12 = 1.0 / math.sqrt(H)
    w1 = jax.random.uniform(k[0], (H, S), f32, -lim12, lim12)
    b1 = jax.random.uniform(k[1], (H,), f32,
                            -1.0 / math.sqrt(S), 1.0 / math.sqrt(S))

    w2 = jax.random.uniform(k[2], (H, H + A), f32, -lim12, lim12)
    b2 = jax.random.uniform(k[3], (H,), f32,
                            -1.0 / math.sqrt(H + A), 1.0 / math.sqrt(H + A))

    w3 = jax.random.uniform(k[4], (1, H), f32, -0.003, 0.003)
    b3 = jax.random.uniform(k[5], (1,), f32,
                            -1.0 / math.sqrt(H), 1.0 / math.sqrt(H))

    w2s, w2a = w2[:, :H], w2[:, H:]

    hp = _round_up(H, hidden_pad_multiple) - H
    if hp:
        w1 = jnp.pad(w1, ((0, hp), (0, 0)))
        b1 = jnp.pad(b1, ((0, hp),))
        w2s = jnp.pad(w2s, ((0, hp), (0, hp)))
        w2a = jnp.pad(w2a, ((0, hp), (0, 0)))
        b2 = jnp.pad(b2, ((0, hp),))
        w3 = jnp.pad(w3, ((0, 0), (0, hp)))

    return (w1, b1[:, None], w2s, w2a, b2[:, None], w3, b3.reshape(1, 1))


def critic_reference(state, action, params):
    """Pure-JAX reference (batch-major) for correctness checks."""
    w1, b1, w2s, w2a, b2, w3, b3 = params
    xs = jnp.maximum(state @ w1.T + b1.T, 0.0)
    h = jnp.maximum(xs @ w2s.T + action @ w2a.T + b2.T, 0.0)
    return h @ w3.T + b3


if __name__ == "__main__":
    B, STATE, ACTION, HIDDEN = 8, 16, 4, 128

    key = jax.random.PRNGKey(0)
    kp, ks, ka = jax.random.split(key, 3)

    params = init_critic_params(kp, STATE, ACTION, HIDDEN)
    state = jax.random.normal(ks, (B, STATE), jnp.float32)
    action = jax.random.normal(ka, (B, ACTION), jnp.float32)
    ref = critic_reference(state, action, params)

    # f32 path
    out = jax.block_until_ready(critic_forward_jit(state, action, params))
    assert out.shape == (B, 1)
    assert jnp.allclose(out, ref, atol=1e-4, rtol=1e-3), \
        float(jnp.max(jnp.abs(out - ref)))

    # multi-step grid + 128-boundary batch padding path (B=300 -> 3 tiles)
    ks2, ka2 = jax.random.split(jax.random.PRNGKey(1))
    state2 = jax.random.normal(ks2, (300, STATE), jnp.float32)
    action2 = jax.random.normal(ka2, (300, ACTION), jnp.float32)
    out2 = jax.block_until_ready(critic_forward_jit(state2, action2, params))
    ref2 = critic_reference(state2, action2, params)
    assert out2.shape == (300, 1)
    assert jnp.allclose(out2, ref2, atol=1e-4, rtol=1e-3), \
        float(jnp.max(jnp.abs(out2 - ref2)))

    # bf16 MXU path (v6e/v7x recommendation) with loosened tolerance
    out_bf16 = jax.block_until_ready(
        critic_forward_jit(state, action, params, compute_dtype=jnp.bfloat16))
    assert jnp.allclose(out_bf16, ref, atol=3e-2, rtol=3e-2), \
        float(jnp.max(jnp.abs(out_bf16 - ref)))

    print("KERNEL_OK")
</pallas_src>

<mosaic_0001>
module attributes {stable_mosaic.version = 11 : i64} {
  func.func @critic_kernel(%arg0: i32, %arg1: memref<128x16xf32, #tpu.memory_space<vmem>>, %arg2: memref<128x4xf32, #tpu.memory_space<vmem>>, %arg3: memref<128x16xf32, #tpu.memory_space<vmem>>, %arg4: memref<128x1xf32, #tpu.memory_space<vmem>>, %arg5: memref<128x128xf32, #tpu.memory_space<vmem>>, %arg6: memref<128x4xf32, #tpu.memory_space<vmem>>, %arg7: memref<128x1xf32, #tpu.memory_space<vmem>>, %arg8: memref<1x128xf32, #tpu.memory_space<vmem>>, %arg9: memref<1x1xf32, #tpu.memory_space<smem>>, %arg10: memref<1x128xf32, #tpu.memory_space<vmem>>) attributes {dimension_semantics = [#tpu.dimension_semantics<parallel>], iteration_bounds = array<i64: 1>, scalar_prefetch = 0 : i64, scratch_operands = 0 : i64, tpu.core_type = #tpu.core_type<tc>, window_params = [{transform_indices = @transform_0, window_bounds = array<i64: 128, 16>}, {transform_indices = @transform_1, window_bounds = array<i64: 128, 4>}, {pipeline_mode = #tpu.pipeline_mode<synchronous>, transform_indices = @transform_2, window_bounds = array<i64: 128, 16>}, {pipeline_mode = #tpu.pipeline_mode<synchronous>, transform_indices = @transform_3, window_bounds = array<i64: 128, 1>}, {pipeline_mode = #tpu.pipeline_mode<synchronous>, transform_indices = @transform_4, window_bounds = array<i64: 128, 128>}, {pipeline_mode = #tpu.pipeline_mode<synchronous>, transform_indices = @transform_5, window_bounds = array<i64: 128, 4>}, {pipeline_mode = #tpu.pipeline_mode<synchronous>, transform_indices = @transform_6, window_bounds = array<i64: 128, 1>}, {pipeline_mode = #tpu.pipeline_mode<synchronous>, transform_indices = @transform_7, window_bounds = array<i64: 1, 128>}, {transform_indices = @transform_8, window_bounds = array<i64: 1, 1>}, {transform_indices = @transform_9, window_bounds = array<i64: 1, 128>}]} {
    %c0 = arith.constant 0 : index
    %c0_0 = arith.constant 0 : index
    %0 = vector.load %arg3[%c0, %c0_0] : memref<128x16xf32, #tpu.memory_space<vmem>>, vector<128x16xf32>
    %c0_1 = arith.constant 0 : index
    %c0_2 = arith.constant 0 : index
    %1 = vector.load %arg1[%c0_1, %c0_2] : memref<128x16xf32, #tpu.memory_space<vmem>>, vector<128x16xf32>
    %cst = arith.constant dense<0.000000e+00> : vector<128x128xf32>
    %2 = tpu.matmul %0, %1, %cst {dimension_numbers = #tpu.dot_dimension_numbers<[1], [1], [0], [0], [0, 0, 1, 0], [], []>} : vector<128x16xf32>, vector<128x16xf32>, vector<128x128xf32> -> vector<128x128xf32>
    %c0_3 = arith.constant 0 : index
    %c0_4 = arith.constant 0 : index
    %3 = vector.load %arg4[%c0_3, %c0_4] : memref<128x1xf32, #tpu.memory_space<vmem>>, vector<128x1xf32>
    %4 = vector.broadcast %3 : vector<128x1xf32> to vector<128x128xf32>
    %5 = arith.addf %2, %4 : vector<128x128xf32>
    %cst_5 = arith.constant 0.000000e+00 : f32
    %6 = vector.broadcast %cst_5 : f32 to vector<128x128xf32>
    %7 = arith.maximumf %5, %6 : vector<128x128xf32>
    %c0_6 = arith.constant 0 : index
    %c0_7 = arith.constant 0 : index
    %8 = vector.load %arg5[%c0_6, %c0_7] : memref<128x128xf32, #tpu.memory_space<vmem>>, vector<128x128xf32>
    %cst_8 = arith.constant dense<0.000000e+00> : vector<128x128xf32>
    %9 = tpu.matmul %8, %7, %cst_8 {dimension_numbers = #tpu.dot_dimension_numbers<[1], [0], [0], [1], [0, 0, 1, 1], [], []>} : vector<128x128xf32>, vector<128x128xf32>, vector<128x128xf32> -> vector<128x128xf32>
    %c0_9 = arith.constant 0 : index
    %c0_10 = arith.constant 0 : index
    %10 = vector.load %arg6[%c0_9, %c0_10] : memref<128x4xf32, #tpu.memory_space<vmem>>, vector<128x4xf32>
    %c0_11 = arith.constant 0 : index
    %c0_12 = arith.constant 0 : index
    %11 = vector.load %arg2[%c0_11, %c0_12] : memref<128x4xf32, #tpu.memory_space<vmem>>, vector<128x4xf32>
    %cst_13 = arith.constant dense<0.000000e+00> : vector<128x128xf32>
    %12 = tpu.matmul %10, %11, %cst_13 {dimension_numbers = #tpu.dot_dimension_numbers<[1], [1], [0], [0], [0, 0, 1, 0], [], []>} : vector<128x4xf32>, vector<128x4xf32>, vector<128x128xf32> -> vector<128x128xf32>
    %13 = arith.addf %9, %12 : vector<128x128xf32>
    %c0_14 = arith.constant 0 : index
    %c0_15 = arith.constant 0 : index
    %14 = vector.load %arg7[%c0_14, %c0_15] : memref<128x1xf32, #tpu.memory_space<vmem>>, vector<128x1xf32>
    %15 = vector.broadcast %14 : vector<128x1xf32> to vector<128x128xf32>
    %16 = arith.addf %13, %15 : vector<128x128xf32>
    %cst_16 = arith.constant 0.000000e+00 : f32
    %17 = vector.broadcast %cst_16 : f32 to vector<128x128xf32>
    %18 = arith.maximumf %16, %17 : vector<128x128xf32>
    %c0_17 = arith.constant 0 : index
    %c0_18 = arith.constant 0 : index
    %19 = vector.load %arg8[%c0_17, %c0_18] : memref<1x128xf32, #tpu.memory_space<vmem>>, vector<1x128xf32>
    %cst_19 = arith.constant dense<0.000000e+00> : vector<1x128xf32>
    %20 = tpu.matmul %19, %18, %cst_19 {dimension_numbers = #tpu.dot_dimension_numbers<[1], [0], [0], [1], [0, 0, 1, 1], [], []>} : vector<1x128xf32>, vector<128x128xf32>, vector<1x128xf32> -> vector<1x128xf32>
    %c0_20 = arith.constant 0 : index
    %c0_21 = arith.constant 0 : index
    %21 = memref.load %arg9[%c0_20, %c0_21] : memref<1x1xf32, #tpu.memory_space<smem>>
    %22 = vector.broadcast %21 : f32 to vector<1x128xf32>
    %23 = arith.addf %20, %22 : vector<1x128xf32>
    %c0_22 = arith.constant 0 : index
    %c0_23 = arith.constant 0 : index
    %24 = vector.load %arg10[%c0_22, %c0_23] : memref<1x128xf32, #tpu.memory_space<vmem>>, vector<1x128xf32>
    tpu.vector_store %arg10[%c0_22, %c0_23], %23 {strides = array<i32>} : memref<1x128xf32, #tpu.memory_space<vmem>>, vector<1x128xf32>,
    return
  }
  func.func @transform_0(%arg0: i32) -> (i32, i32) {
    %c0_i32 = arith.constant 0 : i32
    %c0_i32_0 = arith.constant 0 : i32
    return %arg0, %c0_i32 : i32, i32
  }
  func.func @transform_1(%arg0: i32) -> (i32, i32) {
    %c0_i32 = arith.constant 0 : i32
    %c0_i32_0 = arith.constant 0 : i32
    return %arg0, %c0_i32 : i32, i32
  }
  func.func @transform_2(%arg0: i32) -> (i32, i32) {
    %c0_i32 = arith.constant 0 : i32
    %c0_i32_0 = arith.constant 0 : i32
    %c0_i32_1 = arith.constant 0 : i32
    return %c0_i32, %c0_i32_0 : i32, i32
  }
  func.func @transform_3(%arg0: i32) -> (i32, i32) {
    %c0_i32 = arith.constant 0 : i32
    %c0_i32_0 = arith.constant 0 : i32
    %c0_i32_1 = arith.constant 0 : i32
    return %c0_i32, %c0_i32_0 : i32, i32
  }
  func.func @transform_4(%arg0: i32) -> (i32, i32) {
    %c0_i32 = arith.constant 0 : i32
    %c0_i32_0 = arith.constant 0 : i32
    %c0_i32_1 = arith.constant 0 : i32
    return %c0_i32, %c0_i32_0 : i32, i32
  }
  func.func @transform_5(%arg0: i32) -> (i32, i32) {
    %c0_i32 = arith.constant 0 : i32
    %c0_i32_0 = arith.constant 0 : i32
    %c0_i32_1 = arith.constant 0 : i32
    return %c0_i32, %c0_i32_0 : i32, i32
  }
  func.func @transform_6(%arg0: i32) -> (i32, i32) {
    %c0_i32 = arith.constant 0 : i32
    %c0_i32_0 = arith.constant 0 : i32
    %c0_i32_1 = arith.constant 0 : i32
    return %c0_i32, %c0_i32_0 : i32, i32
  }
  func.func @transform_7(%arg0: i32) -> (i32, i32) {
    %c0_i32 = arith.constant 0 : i32
    %c0_i32_0 = arith.constant 0 : i32
    %c0_i32_1 = arith.constant 0 : i32
    return %c0_i32, %c0_i32_0 : i32, i32
  }
  func.func @transform_8(%arg0: i32) -> (i32, i32) {
    %c0_i32 = arith.constant 0 : i32
    %c0_i32_0 = arith.constant 0 : i32
    %c0_i32_1 = arith.constant 0 : i32
    return %c0_i32, %c0_i32_0 : i32, i32
  }
  func.func @transform_9(%arg0: i32) -> (i32, i32) {
    %c0_i32 = arith.constant 0 : i32
    %c0_i32_0 = arith.constant 0 : i32
    return %c0_i32, %arg0 : i32, i32
  }
}

</mosaic_0001>

<llo_original>
// kernel: critic_forward.1
$region0: #{critic_forward.1}
  #allocation0 [shape = 'u32[]', space=smem, size = 0x4, offset = 0x4, fixed_abs, tag = 'smem constant byte address 0x4 - core index']
  #allocation1 [shape = 'u32[72,128]{1,0:T(1,128)}', space=vmem, size = 0x9000, scoped, tag = 'internal scratch']
  #allocation2 [shape = 'f32[1,1]{1,0:T(1,128)S(6)}', space=smem, size = 0x200, scoped, tag = 'scoped memory for critic_forward.1']
  %s0 = inlined_call_operand.vmem [shape: f32[128,16], index: 0, kind: input, shape index: {}]
  %s1 = inlined_call_operand.vmem [shape: f32[128,4], index: 1, kind: input, shape index: {}]
  %s2 = inlined_call_operand.vmem [shape: f32[128,16], index: 2, kind: input, shape index: {}]
  %s3 = inlined_call_operand.vmem [shape: f32[128,1], index: 3, kind: input, shape index: {}]
  %s4 = inlined_call_operand.vmem [shape: f32[128,128], index: 4, kind: input, shape index: {}]
  %s5 = inlined_call_operand.vmem [shape: f32[128,4], index: 5, kind: input, shape index: {}]
  %s6 = inlined_call_operand.vmem [shape: f32[128,1], index: 6, kind: input, shape index: {}]
  %s7 = inlined_call_operand.vmem [shape: f32[1,128], index: 7, kind: input, shape index: {}]
  %s8 = inlined_call_operand.<no memory space> [shape: f32[1,1], index: 8, kind: input, shape index: {}]
  %s9 = inlined_call_operand.vmem [shape: f32[1,128], index: 9, kind: output, shape index: {}]
  %s10 = sld [smem:[#allocation0]]
  $region46: #{critic_forward.1} parent=0
    _
  %s12 = ssub.s32 1, %s10
  %s13 = scalar_select 0, %s12, %s10
  %14 = sst [smem:[#allocation2]] %s8
  // Predicated region
  $region2: #{critic_forward.1} parent=0 // pred_check
    _
  $region3: #{critic_forward.1} parent=0 // pred_check_branch
    %16 = sbr.rel (0) target = $region5
  $region4: #{critic_forward.1} parent=0 // pred_region
    _
  $region5: #{critic_forward.1} parent=0 // pred_fallthru
    _
  // Predicated region
  $region6: #{critic_forward.1} parent=0 // pred_check
    _
  $region7: #{critic_forward.1} parent=0 // pred_check_branch
    %18 = sbr.rel (0) target = $region9
  $region8: #{critic_forward.1} parent=0 // pred_region
    _
  $region9: #{critic_forward.1} parent=0 // pred_fallthru
    _
  // Predicated region
  $region10: #{critic_forward.1} parent=0 // pred_check
    _
  $region11: #{critic_forward.1} parent=0 // pred_check_branch
    %20 = sbr.rel (0) target = $region13
  $region12: #{critic_forward.1} parent=0 // pred_region
    _
  $region13: #{critic_forward.1} parent=0 // pred_fallthru
    _
  // Predicated region
  $region14: #{critic_forward.1} parent=0 // pred_check
    _
  $region15: #{critic_forward.1} parent=0 // pred_check_branch
    %22 = sbr.rel (0) target = $region17
  $region16: #{critic_forward.1} parent=0 // pred_region
    _
  $region17: #{critic_forward.1} parent=0 // pred_fallthru
    _
  // Predicated region
  $region18: #{critic_forward.1} parent=0 // pred_check
    _
  $region19: #{critic_forward.1} parent=0 // pred_check_branch
    %24 = sbr.rel (0) target = $region21
  $region20: #{critic_forward.1} parent=0 // pred_region
    _
  $region21: #{critic_forward.1} parent=0 // pred_fallthru
    _
  // Predicated region
  $region22: #{critic_forward.1} parent=0 // pred_check
    _
  $region23: #{critic_forward.1} parent=0 // pred_check_branch
    %26 = sbr.rel (0) target = $region25
  $region24: #{critic_forward.1} parent=0 // pred_region
    _
  $region25: #{critic_forward.1} parent=0 // pred_fallthru
    _
  // Predicated region
  $region26: #{critic_forward.1} parent=0 // pred_check
    _
  $region27: #{critic_forward.1} parent=0 // pred_check_branch
    %28 = sbr.rel (0) target = $region29
  $region28: #{critic_forward.1} parent=0 // pred_region
    _
  $region29: #{critic_forward.1} parent=0 // pred_fallthru
    _
  // Predicated region
  $region30: #{critic_forward.1} parent=0 // pred_check
    _
  $region31: #{critic_forward.1} parent=0 // pred_check_branch
    %30 = sbr.rel (0) target = $region33
  $region32: #{critic_forward.1} parent=0 // pred_region
    _
  $region33: #{critic_forward.1} parent=0 // pred_fallthru
    _
  // Predicated region
  $region34: #{critic_forward.1} parent=0 // pred_check
    _
  $region35: #{critic_forward.1} parent=0 // pred_check_branch
    %32 = sbr.rel (0) target = $region37
  $region36: #{critic_forward.1} parent=0 // pred_region
    _
  $region37: #{critic_forward.1} parent=0 // pred_fallthru
    _
  %v33 = vld [vmem:[%s2] sm:$0xff]
  %v34 = vld [vmem:[%s2 + $0x8] sm:$0xff]
  %v35 = vld [vmem:[%s2 + $0x10] sm:$0xff]
  %v36 = vld [vmem:[%s2 + $0x18] sm:$0xff]
  %v37 = vld [vmem:[%s2 + $0x20] sm:$0xff]
  %v38 = vld [vmem:[%s2 + $0x28] sm:$0xff]
  %v39 = vld [vmem:[%s2 + $0x30] sm:$0xff]
  %v40 = vld [vmem:[%s2 + $0x38] sm:$0xff]
  %v41 = vld [vmem:[%s2 + $0x40] sm:$0xff]
  %v42 = vld [vmem:[%s2 + $0x48] sm:$0xff]
  %v43 = vld [vmem:[%s2 + $0x50] sm:$0xff]
  %v44 = vld [vmem:[%s2 + $0x58] sm:$0xff]
  %v45 = vld [vmem:[%s2 + $0x60] sm:$0xff]
  %v46 = vld [vmem:[%s2 + $0x68] sm:$0xff]
  %v47 = vld [vmem:[%s2 + $0x70] sm:$0xff]
  %v48 = vld [vmem:[%s2 + $0x78] sm:$0xff]
  %v49 = vld [vmem:[%s0] sm:$0xff]
  %v50 = vld [vmem:[%s0 + $0x8] sm:$0xff]
  %v51 = vld [vmem:[%s0 + $0x10] sm:$0xff]
  %v52 = vld [vmem:[%s0 + $0x18] sm:$0xff]
  %v53 = vld [vmem:[%s0 + $0x20] sm:$0xff]
  %v54 = vld [vmem:[%s0 + $0x28] sm:$0xff]
  %v55 = vld [vmem:[%s0 + $0x30] sm:$0xff]
  %v56 = vld [vmem:[%s0 + $0x38] sm:$0xff]
  %v57 = vld [vmem:[%s0 + $0x40] sm:$0xff]
  %v58 = vld [vmem:[%s0 + $0x48] sm:$0xff]
  %v59 = vld [vmem:[%s0 + $0x50] sm:$0xff]
  %v60 = vld [vmem:[%s0 + $0x58] sm:$0xff]
  %v61 = vld [vmem:[%s0 + $0x60] sm:$0xff]
  %v62 = vld [vmem:[%s0 + $0x68] sm:$0xff]
  %v63 = vld [vmem:[%s0 + $0x70] sm:$0xff]
  %v64 = vld [vmem:[%s0 + $0x78] sm:$0xff]
  %v65 = vld [vmem:[%s3] sm:$0xff]
  %v66 = vld [vmem:[%s3 + $0x8] sm:$0xff]
  %v67 = vld [vmem:[%s3 + $0x10] sm:$0xff]
  %v68 = vld [vmem:[%s3 + $0x18] sm:$0xff]
  %v69 = vld [vmem:[%s3 + $0x20] sm:$0xff]
  %v70 = vld [vmem:[%s3 + $0x28] sm:$0xff]
  %v71 = vld [vmem:[%s3 + $0x30] sm:$0xff]
  %v72 = vld [vmem:[%s3 + $0x38] sm:$0xff]
  %v73 = vld [vmem:[%s3 + $0x40] sm:$0xff]
  %v74 = vld [vmem:[%s3 + $0x48] sm:$0xff]
  %v75 = vld [vmem:[%s3 + $0x50] sm:$0xff]
  %v76 = vld [vmem:[%s3 + $0x58] sm:$0xff]
  %v77 = vld [vmem:[%s3 + $0x60] sm:$0xff]
  %v78 = vld [vmem:[%s3 + $0x68] sm:$0xff]
  %v79 = vld [vmem:[%s3 + $0x70] sm:$0xff]
  %v80 = vld [vmem:[%s3 + $0x78] sm:$0xff]
  %82 = vset.pattern.permute.xlu0 0
  %83 = vperm.xlu0 %82, %v65
  %v84 = vpop.permute.xlu0 %83
  %87 = vset.pattern.permute.xlu0 0
  %88 = vperm.xlu0 %87, %v66
  %v89 = vpop.permute.xlu0 %88
  %92 = vset.pattern.permute.xlu0 0
  %93 = vperm.xlu0 %92, %v67
  %v94 = vpop.permute.xlu0 %93
  %97 = vset.pattern.permute.xlu0 0
  %98 = vperm.xlu0 %97, %v68
  %v99 = vpop.permute.xlu0 %98
  %102 = vset.pattern.permute.xlu0 0
  %103 = vperm.xlu0 %102, %v69
  %v104 = vpop.permute.xlu0 %103
  %107 = vset.pattern.permute.xlu0 0
  %108 = vperm.xlu0 %107, %v70
  %v109 = vpop.permute.xlu0 %108
  %112 = vset.pattern.permute.xlu0 0
  %113 = vperm.xlu0 %112, %v71
  %v114 = vpop.permute.xlu0 %113
  %117 = vset.pattern.permute.xlu0 0
  %118 = vperm.xlu0 %117, %v72
  %v119 = vpop.permute.xlu0 %118
  %122 = vset.pattern.permute.xlu0 0
  %123 = vperm.xlu0 %122, %v73
  %v124 = vpop.permute.xlu0 %123
  %127 = vset.pattern.permute.xlu0 0
  %128 = vperm.xlu0 %127, %v74
  %v129 = vpop.permute.xlu0 %128
  %132 = vset.pattern.permute.xlu0 0
  %133 = vperm.xlu0 %132, %v75
  %v134 = vpop.permute.xlu0 %133
  %137 = vset.pattern.permute.xlu0 0
  %138 = vperm.xlu0 %137, %v76
  %v139 = vpop.permute.xlu0 %138
  %142 = vset.pattern.permute.xlu0 0
  %143 = vperm.xlu0 %142, %v77
  %v144 = vpop.permute.xlu0 %143
  %147 = vset.pattern.permute.xlu0 0
  %148 = vperm.xlu0 %147, %v78
  %v149 = vpop.permute.xlu0 %148
  %152 = vset.pattern.permute.xlu0 0
  %153 = vperm.xlu0 %152, %v79
  %v154 = vpop.permute.xlu0 %153
  %157 = vset.pattern.permute.xlu0 0
  %158 = vperm.xlu0 %157, %v80
  %v159 = vpop.permute.xlu0 %158
  %vm161 = vcmask 130048
  %v163 = vsel %vm161, %v33, 0
  %v166 = vsel %vm161, %v34, 0
  %v169 = vsel %vm161, %v35, 0
  %v172 = vsel %vm161, %v36, 0
  %v175 = vsel %vm161, %v37, 0
  %v178 = vsel %vm161, %v38, 0
  %v181 = vsel %vm161, %v39, 0
  %v184 = vsel %vm161, %v40, 0
  %v187 = vsel %vm161, %v41, 0
  %v190 = vsel %vm161, %v42, 0
  %v193 = vsel %vm161, %v43, 0
  %v196 = vsel %vm161, %v44, 0
  %v199 = vsel %vm161, %v45, 0
  %v202 = vsel %vm161, %v46, 0
  %v205 = vsel %vm161, %v47, 0
  %v208 = vsel %vm161, %v48, 0
  %v211 = vsel %vm161, %v49, 0
  %v214 = vsel %vm161, %v50, 0
  %v217 = vsel %vm161, %v51, 0
  %v220 = vsel %vm161, %v52, 0
  %v223 = vsel %vm161, %v53, 0
  %v226 = vsel %vm161, %v54, 0
  %v229 = vsel %vm161, %v55, 0
  %v232 = vsel %vm161, %v56, 0
  %v235 = vsel %vm161, %v57, 0
  %v238 = vsel %vm161, %v58, 0
  %v241 = vsel %vm161, %v59, 0
  %v244 = vsel %vm161, %v60, 0
  %v247 = vsel %vm161, %v61, 0
  %v250 = vsel %vm161, %v62, 0
  %v253 = vsel %vm161, %v63, 0
  %v256 = vsel %vm161, %v64, 0
  %258 = vmatpush.xpose.msra.mxu0 %v256
  %259 = vmatpush.xpose.msra.mxu0 %v253
  %260 = vmatpush.xpose.msra.mxu0 %v250
  %261 = vmatpush.xpose.msra.mxu0 %v247
  %262 = vmatpush.xpose.msra.mxu0 %v244
  %263 = vmatpush.xpose.msra.mxu0 %v241
  %264 = vmatpush.xpose.msra.mxu0 %v238
  %265 = vmatpush.xpose.msra.mxu0 %v235
  %266 = vmatpush.xpose.msra.mxu0 %v232
  %267 = vmatpush.xpose.msra.mxu0 %v229
  %268 = vmatpush.xpose.msra.mxu0 %v226
  %269 = vmatpush.xpose.msra.mxu0 %v223
  %270 = vmatpush.xpose.msra.mxu0 %v220
  %271 = vmatpush.xpose.msra.mxu0 %v217
  %272 = vmatpush.xpose.msra.mxu0 %v214
  %273 = vmatpush.xpose.msra.mxu0 %v211
  %274 = vmatmul.f32.gmra.mxu0 %v163
  %v275 = vpop.f32.mrf.mxu0
  %v276 = vadd.f32 %v84, %v275
  %277 = vmatmul.f32.gmra.mxu0 %v166
  %v278 = vpop.f32.mrf.mxu0
  %v279 = vadd.f32 %v89, %v278
  %280 = vmatmul.f32.gmra.mxu0 %v169
  %v281 = vpop.f32.mrf.mxu0
  %v282 = vadd.f32 %v94, %v281
  %283 = vmatmul.f32.gmra.mxu0 %v172
  %v284 = vpop.f32.mrf.mxu0
  %v285 = vadd.f32 %v99, %v284
  %286 = vmatmul.f32.gmra.mxu0 %v175
  %v287 = vpop.f32.mrf.mxu0
  %v288 = vadd.f32 %v104, %v287
  %289 = vmatmul.f32.gmra.mxu0 %v178
  %v290 = vpop.f32.mrf.mxu0
  %v291 = vadd.f32 %v109, %v290
  %292 = vmatmul.f32.gmra.mxu0 %v181
  %v293 = vpop.f32.mrf.mxu0
  %v294 = vadd.f32 %v114, %v293
  %295 = vmatmul.f32.gmra.mxu0 %v184
  %v296 = vpop.f32.mrf.mxu0
  %v297 = vadd.f32 %v119, %v296
  %298 = vmatmul.f32.gmra.mxu0 %v187
  %v299 = vpop.f32.mrf.mxu0
  %v300 = vadd.f32 %v124, %v299
  %301 = vmatmul.f32.gmra.mxu0 %v190
  %v302 = vpop.f32.mrf.mxu0
  %v303 = vadd.f32 %v129, %v302
  %304 = vmatmul.f32.gmra.mxu0 %v193
  %v305 = vpop.f32.mrf.mxu0
  %v306 = vadd.f32 %v134, %v305
  %307 = vmatmul.f32.gmra.mxu0 %v196
  %v308 = vpop.f32.mrf.mxu0
  %v309 = vadd.f32 %v139, %v308
  %310 = vmatmul.f32.gmra.mxu0 %v199
  %v311 = vpop.f32.mrf.mxu0
  %v312 = vadd.f32 %v144, %v311
  %313 = vmatmul.f32.gmra.mxu0 %v202
  %v314 = vpop.f32.mrf.mxu0
  %v315 = vadd.f32 %v149, %v314
  %316 = vmatmul.f32.gmra.mxu0 %v205
  %v317 = vpop.f32.mrf.mxu0
  %v318 = vadd.f32 %v154, %v317
  %319 = vmatmul.f32.gmra.mxu0 %v208
  %v320 = vpop.f32.mrf.mxu0
  %v321 = vadd.f32 %v159, %v320
  %322 = vdwg.mxu0
  %v323 = vmax.f32 %v276, 0.0
  %v324 = vmax.f32 %v279, 0.0
  %v325 = vmax.f32 %v282, 0.0
  %v326 = vmax.f32 %v285, 0.0
  %v327 = vmax.f32 %v288, 0.0
  %v328 = vmax.f32 %v291, 0.0
  %v329 = vmax.f32 %v294, 0.0
  %v330 = vmax.f32 %v297, 0.0
  %v331 = vmax.f32 %v300, 0.0
  %v332 = vmax.f32 %v303, 0.0
  %v333 = vmax.f32 %v306, 0.0
  %v334 = vmax.f32 %v309, 0.0
  %v335 = vmax.f32 %v312, 0.0
  %v336 = vmax.f32 %v315, 0.0
  %v337 = vmax.f32 %v318, 0.0
  %v338 = vmax.f32 %v321, 0.0
  %v339 = vld [vmem:[%s4] sm:$0xff]
  %v340 = vld [vmem:[%s4 + $0x8] sm:$0xff]
  %v341 = vld [vmem:[%s4 + $0x10] sm:$0xff]
  %v342 = vld [vmem:[%s4 + $0x18] sm:$0xff]
  %v343 = vld [vmem:[%s4 + $0x20] sm:$0xff]
  %v344 = vld [vmem:[%s4 + $0x28] sm:$0xff]
  %v345 = vld [vmem:[%s4 + $0x30] sm:$0xff]
  %v346 = vld [vmem:[%s4 + $0x38] sm:$0xff]
  %v347 = vld [vmem:[%s4 + $0x40] sm:$0xff]
  %v348 = vld [vmem:[%s4 + $0x48] sm:$0xff]
  %v349 = vld [vmem:[%s4 + $0x50] sm:$0xff]
  %v350 = vld [vmem:[%s4 + $0x58] sm:$0xff]
  %v351 = vld [vmem:[%s4 + $0x60] sm:$0xff]
  %v352 = vld [vmem:[%s4 + $0x68] sm:$0xff]
  %v353 = vld [vmem:[%s4 + $0x70] sm:$0xff]
  %v354 = vld [vmem:[%s4 + $0x78] sm:$0xff]
  %v355 = vld [vmem:[%s5] sm:$0xff]
  %v356 = vld [vmem:[%s5 + $0x8] sm:$0xff]
  %v357 = vld [vmem:[%s5 + $0x10] sm:$0xff]
  %v358 = vld [vmem:[%s5 + $0x18] sm:$0xff]
  %v359 = vld [vmem:[%s5 + $0x20] sm:$0xff]
  %v360 = vld [vmem:[%s5 + $0x28] sm:$0xff]
  %v361 = vld [vmem:[%s5 + $0x30] sm:$0xff]
  %v362 = vld [vmem:[%s5 + $0x38] sm:$0xff]
  %v363 = vld [vmem:[%s5 + $0x40] sm:$0xff]
  %v364 = vld [vmem:[%s5 + $0x48] sm:$0xff]
  %v365 = vld [vmem:[%s5 + $0x50] sm:$0xff]
  %v366 = vld [vmem:[%s5 + $0x58] sm:$0xff]
  %v367 = vld [vmem:[%s5 + $0x60] sm:$0xff]
  %v368 = vld [vmem:[%s5 + $0x68] sm:$0xff]
  %v369 = vld [vmem:[%s5 + $0x70] sm:$0xff]
  %v370 = vld [vmem:[%s5 + $0x78] sm:$0xff]
  %v371 = vld [vmem:[%s1] sm:$0xff]
  %v372 = vld [vmem:[%s1 + $0x8] sm:$0xff]
  %v373 = vld [vmem:[%s1 + $0x10] sm:$0xff]
  %v374 = vld [vmem:[%s1 + $0x18] sm:$0xff]
  %v375 = vld [vmem:[%s1 + $0x20] sm:$0xff]
  %v376 = vld [vmem:[%s1 + $0x28] sm:$0xff]
  %v377 = vld [vmem:[%s1 + $0x30] sm:$0xff]
  %v378 = vld [vmem:[%s1 + $0x38] sm:$0xff]
  %v379 = vld [vmem:[%s1 + $0x40] sm:$0xff]
  %v380 = vld [vmem:[%s1 + $0x48] sm:$0xff]
  %v381 = vld [vmem:[%s1 + $0x50] sm:$0xff]
  %v382 = vld [vmem:[%s1 + $0x58] sm:$0xff]
  %v383 = vld [vmem:[%s1 + $0x60] sm:$0xff]
  %v384 = vld [vmem:[%s1 + $0x68] sm:$0xff]
  %v385 = vld [vmem:[%s1 + $0x70] sm:$0xff]
  %v386 = vld [vmem:[%s1 + $0x78] sm:$0xff]
  %vm387 = vcmask 31744
  %v389 = vsel %vm387, %v355, 0
  %v392 = vsel %vm387, %v356, 0
  %v395 = vsel %vm387, %v357, 0
  %v398 = vsel %vm387, %v358, 0
  %v401 = vsel %vm387, %v359, 0
  %v404 = vsel %vm387, %v360, 0
  %v407 = vsel %vm387, %v361, 0
  %v410 = vsel %vm387, %v362, 0
  %v413 = vsel %vm387, %v363, 0
  %v416 = vsel %vm387, %v364, 0
  %v419 = vsel %vm387, %v365, 0
  %v422 = vsel %vm387, %v366, 0
  %v425 = vsel %vm387, %v367, 0
  %v428 = vsel %vm387, %v368, 0
  %v431 = vsel %vm387, %v369, 0
  %v434 = vsel %vm387, %v370, 0
  %v437 = vsel %vm387, %v371, 0
  %v440 = vsel %vm387, %v372, 0
  %v443 = vsel %vm387, %v373, 0
  %v446 = vsel %vm387, %v374, 0
  %v449 = vsel %vm387, %v375, 0
  %v452 = vsel %vm387, %v376, 0
  %v455 = vsel %vm387, %v377, 0
  %v458 = vsel %vm387, %v378, 0
  %v461 = vsel %vm387, %v379, 0
  %v464 = vsel %vm387, %v380, 0
  %v467 = vsel %vm387, %v381, 0
  %v470 = vsel %vm387, %v382, 0
  %v473 = vsel %vm387, %v383, 0
  %v476 = vsel %vm387, %v384, 0
  %v479 = vsel %vm387, %v385, 0
  %v482 = vsel %vm387, %v386, 0
  %484 = vmatpush.xpose.msra.mxu0 %v482
  %485 = vmatpush.xpose.msra.mxu0 %v479
  %486 = vmatpush.xpose.msra.mxu0 %v476
  %487 = vmatpush.xpose.msra.mxu0 %v473
  %488 = vmatpush.xpose.msra.mxu0 %v470
  %489 = vmatpush.xpose.msra.mxu0 %v467
  %490 = vmatpush.xpose.msra.mxu0 %v464
  %491 = vmatpush.xpose.msra.mxu0 %v461
  %492 = vmatpush.xpose.msra.mxu0 %v458
  %493 = vmatpush.xpose.msra.mxu0 %v455
  %494 = vmatpush.xpose.msra.mxu0 %v452
  %495 = vmatpush.xpose.msra.mxu0 %v449
  %496 = vmatpush.xpose.msra.mxu0 %v446
  %497 = vmatpush.xpose.msra.mxu0 %v443
  %498 = vmatpush.xpose.msra.mxu0 %v440
  %499 = vmatpush.xpose.msra.mxu0 %v437
  %500 = vmatmul.f32.gmra.mxu0 %v389
  %v501 = vpop.f32.mrf.mxu0
  %v502 = vadd.f32 0.0, %v501
  %503 = vmatmul.f32.gmra.mxu0 %v392
  %v504 = vpop.f32.mrf.mxu0
  %v505 = vadd.f32 0.0, %v504
  %506 = vmatmul.f32.gmra.mxu0 %v395
  %v507 = vpop.f32.mrf.mxu0
  %v508 = vadd.f32 0.0, %v507
  %509 = vmatmul.f32.gmra.mxu0 %v398
  %v510 = vpop.f32.mrf.mxu0
  %v511 = vadd.f32 0.0, %v510
  %512 = vmatmul.f32.gmra.mxu0 %v401
  %v513 = vpop.f32.mrf.mxu0
  %v514 = vadd.f32 0.0, %v513
  %515 = vmatmul.f32.gmra.mxu0 %v404
  %v516 = vpop.f32.mrf.mxu0
  %v517 = vadd.f32 0.0, %v516
  %518 = vmatmul.f32.gmra.mxu0 %v407
  %v519 = vpop.f32.mrf.mxu0
  %v520 = vadd.f32 0.0, %v519
  %521 = vmatmul.f32.gmra.mxu0 %v410
  %v522 = vpop.f32.mrf.mxu0
  %v523 = vadd.f32 0.0, %v522
  %524 = vmatmul.f32.gmra.mxu0 %v413
  %v525 = vpop.f32.mrf.mxu0
  %v526 = vadd.f32 0.0, %v525
  %527 = vmatmul.f32.gmra.mxu0 %v416
  %v528 = vpop.f32.mrf.mxu0
  %v529 = vadd.f32 0.0, %v528
  %530 = vmatmul.f32.gmra.mxu0 %v419
  %v531 = vpop.f32.mrf.mxu0
  %v532 = vadd.f32 0.0, %v531
  %533 = vmatmul.f32.gmra.mxu0 %v422
  %v534 = vpop.f32.mrf.mxu0
  %v535 = vadd.f32 0.0, %v534
  %536 = vmatmul.f32.gmra.mxu0 %v425
  %v537 = vpop.f32.mrf.mxu0
  %v538 = vadd.f32 0.0, %v537
  %539 = vmatmul.f32.gmra.mxu0 %v428
  %v540 = vpop.f32.mrf.mxu0
  %v541 = vadd.f32 0.0, %v540
  %542 = vmatmul.f32.gmra.mxu0 %v431
  %v543 = vpop.f32.mrf.mxu0
  %v544 = vadd.f32 0.0, %v543
  %545 = vmatmul.f32.gmra.mxu0 %v434
  %v546 = vpop.f32.mrf.mxu0
  %v547 = vadd.f32 0.0, %v546
  %548 = vdwg.mxu0
  %549 = vmatpush.msra.mxu0 %v338
  %550 = vmatpush.msra.mxu0 %v337
  %551 = vmatpush.msra.mxu0 %v336
  %552 = vmatpush.msra.mxu0 %v335
  %553 = vmatpush.msra.mxu0 %v334
  %554 = vmatpush.msra.mxu0 %v333
  %555 = vmatpush.msra.mxu0 %v332
  %556 = vmatpush.msra.mxu0 %v331
  %557 = vmatpush.msra.mxu0 %v330
  %558 = vmatpush.msra.mxu0 %v329
  %559 = vmatpush.msra.mxu0 %v328
  %560 = vmatpush.msra.mxu0 %v327
  %561 = vmatpush.msra.mxu0 %v326
  %562 = vmatpush.msra.mxu0 %v325
  %563 = vmatpush.msra.mxu0 %v324
  %564 = vmatpush.msra.mxu0 %v323
  %565 = vmatmul.f32.gmra.mxu0 %v339
  %v566 = vpop.f32.mrf.mxu0
  %v567 = vadd.f32 %v502, %v566
  %568 = vmatmul.f32.gmra.mxu0 %v340
  %v569 = vpop.f32.mrf.mxu0
  %v570 = vadd.f32 %v505, %v569
  %571 = vmatmul.f32.gmra.mxu0 %v341
  %v572 = vpop.f32.mrf.mxu0
  %v573 = vadd.f32 %v508, %v572
  %574 = vmatmul.f32.gmra.mxu0 %v342
  %v575 = vpop.f32.mrf.mxu0
  %v576 = vadd.f32 %v511, %v575
  %577 = vmatmul.f32.gmra.mxu0 %v343
  %v578 = vpop.f32.mrf.mxu0
  %v579 = vadd.f32 %v514, %v578
  %580 = vmatmul.f32.gmra.mxu0 %v344
  %v581 = vpop.f32.mrf.mxu0
  %v582 = vadd.f32 %v517, %v581
  %583 = vmatmul.f32.gmra.mxu0 %v345
  %v584 = vpop.f32.mrf.mxu0
  %v585 = vadd.f32 %v520, %v584
  %586 = vmatmul.f32.gmra.mxu0 %v346
  %v587 = vpop.f32.mrf.mxu0
  %v588 = vadd.f32 %v523, %v587
  %589 = vmatmul.f32.gmra.mxu0 %v347
  %v590 = vpop.f32.mrf.mxu0
  %v591 = vadd.f32 %v526, %v590
  %592 = vmatmul.f32.gmra.mxu0 %v348
  %v593 = vpop.f32.mrf.mxu0
  %v594 = vadd.f32 %v529, %v593
  %595 = vmatmul.f32.gmra.mxu0 %v349
  %v596 = vpop.f32.mrf.mxu0
  %v597 = vadd.f32 %v532, %v596
  %598 = vmatmul.f32.gmra.mxu0 %v350
  %v599 = vpop.f32.mrf.mxu0
  %v600 = vadd.f32 %v535, %v599
  %601 = vmatmul.f32.gmra.mxu0 %v351
  %v602 = vpop.f32.mrf.mxu0
  %v603 = vadd.f32 %v538, %v602
  %604 = vmatmul.f32.gmra.mxu0 %v352
  %v605 = vpop.f32.mrf.mxu0
  %v606 = vadd.f32 %v541, %v605
  %607 = vmatmul.f32.gmra.mxu0 %v353
  %v608 = vpop.f32.mrf.mxu0
  %v609 = vadd.f32 %v544, %v608
  %610 = vmatmul.f32.gmra.mxu0 %v354
  %v611 = vpop.f32.mrf.mxu0
  %v612 = vadd.f32 %v547, %v611
  %613 = vdwg.mxu0
  %v614 = vld [vmem:[%s6] sm:$0xff]
  %v615 = vld [vmem:[%s6 + $0x8] sm:$0xff]
  %v616 = vld [vmem:[%s6 + $0x10] sm:$0xff]
  %v617 = vld [vmem:[%s6 + $0x18] sm:$0xff]
  %v618 = vld [vmem:[%s6 + $0x20] sm:$0xff]
  %v619 = vld [vmem:[%s6 + $0x28] sm:$0xff]
  %v620 = vld [vmem:[%s6 + $0x30] sm:$0xff]
  %v621 = vld [vmem:[%s6 + $0x38] sm:$0xff]
  %v622 = vld [vmem:[%s6 + $0x40] sm:$0xff]
  %v623 = vld [vmem:[%s6 + $0x48] sm:$0xff]
  %v624 = vld [vmem:[%s6 + $0x50] sm:$0xff]
  %v625 = vld [vmem:[%s6 + $0x58] sm:$0xff]
  %v626 = vld [vmem:[%s6 + $0x60] sm:$0xff]
  %v627 = vld [vmem:[%s6 + $0x68] sm:$0xff]
  %v628 = vld [vmem:[%s6 + $0x70] sm:$0xff]
  %v629 = vld [vmem:[%s6 + $0x78] sm:$0xff]
  %631 = vset.pattern.permute.xlu0 0
  %632 = vperm.xlu0 %631, %v614
  %v633 = vpop.permute.xlu0 %632
  %636 = vset.pattern.permute.xlu0 0
  %637 = vperm.xlu0 %636, %v615
  %v638 = vpop.permute.xlu0 %637
  %641 = vset.pattern.permute.xlu0 0
  %642 = vperm.xlu0 %641, %v616
  %v643 = vpop.permute.xlu0 %642
  %646 = vset.pattern.permute.xlu0 0
  %647 = vperm.xlu0 %646, %v617
  %v648 = vpop.permute.xlu0 %647
  %651 = vset.pattern.permute.xlu0 0
  %652 = vperm.xlu0 %651, %v618
  %v653 = vpop.permute.xlu0 %652
  %656 = vset.pattern.permute.xlu0 0
  %657 = vperm.xlu0 %656, %v619
  %v658 = vpop.permute.xlu0 %657
  %661 = vset.pattern.permute.xlu0 0
  %662 = vperm.xlu0 %661, %v620
  %v663 = vpop.permute.xlu0 %662
  %666 = vset.pattern.permute.xlu0 0
  %667 = vperm.xlu0 %666, %v621
  %v668 = vpop.permute.xlu0 %667
  %671 = vset.pattern.permute.xlu0 0
  %672 = vperm.xlu0 %671, %v622
  %v673 = vpop.permute.xlu0 %672
  %676 = vset.pattern.permute.xlu0 0
  %677 = vperm.xlu0 %676, %v623
  %v678 = vpop.permute.xlu0 %677
  %681 = vset.pattern.permute.xlu0 0
  %682 = vperm.xlu0 %681, %v624
  %v683 = vpop.permute.xlu0 %682
  %686 = vset.pattern.permute.xlu0 0
  %687 = vperm.xlu0 %686, %v625
  %v688 = vpop.permute.xlu0 %687
  %691 = vset.pattern.permute.xlu0 0
  %692 = vperm.xlu0 %691, %v626
  %v693 = vpop.permute.xlu0 %692
  %696 = vset.pattern.permute.xlu0 0
  %697 = vperm.xlu0 %696, %v627
  %v698 = vpop.permute.xlu0 %697
  %701 = vset.pattern.permute.xlu0 0
  %702 = vperm.xlu0 %701, %v628
  %v703 = vpop.permute.xlu0 %702
  %706 = vset.pattern.permute.xlu0 0
  %707 = vperm.xlu0 %706, %v629
  %v708 = vpop.permute.xlu0 %707
  %v710 = vadd.f32 %v567, %v633
  %v711 = vadd.f32 %v570, %v638
  %v712 = vadd.f32 %v573, %v643
  %v713 = vadd.f32 %v576, %v648
  %v714 = vadd.f32 %v579, %v653
  %v715 = vadd.f32 %v582, %v658
  %v716 = vadd.f32 %v585, %v663
  %v717 = vadd.f32 %v588, %v668
  %v718 = vadd.f32 %v591, %v673
  %v719 = vadd.f32 %v594, %v678
  %v720 = vadd.f32 %v597, %v683
  %v721 = vadd.f32 %v600, %v688
  %v722 = vadd.f32 %v603, %v693
  %v723 = vadd.f32 %v606, %v698
  %v724 = vadd.f32 %v609, %v703
  %v725 = vadd.f32 %v612, %v708
  %v726 = vmax.f32 %v710, 0.0
  %v727 = vmax.f32 %v711, 0.0
  %v728 = vmax.f32 %v712, 0.0
  %v729 = vmax.f32 %v713, 0.0
  %v730 = vmax.f32 %v714, 0.0
  %v731 = vmax.f32 %v715, 0.0
  %v732 = vmax.f32 %v716, 0.0
  %v733 = vmax.f32 %v717, 0.0
  %v734 = vmax.f32 %v718, 0.0
  %v735 = vmax.f32 %v719, 0.0
  %v736 = vmax.f32 %v720, 0.0
  %v737 = vmax.f32 %v721, 0.0
  %v738 = vmax.f32 %v722, 0.0
  %v739 = vmax.f32 %v723, 0.0
  %v740 = vmax.f32 %v724, 0.0
  %v741 = vmax.f32 %v725, 0.0
  %v742 = vld [vmem:[%s7] sm:$0x1]
  %s743 = sld [smem:[#allocation2]]
  %v744 = vstv %s743
  %745 = vmatpush.msra.mxu0 %v741
  %746 = vmatpush.msra.mxu0 %v740
  %747 = vmatpush.msra.mxu0 %v739
  %748 = vmatpush.msra.mxu0 %v738
  %749 = vmatpush.msra.mxu0 %v737
  %750 = vmatpush.msra.mxu0 %v736
  %751 = vmatpush.msra.mxu0 %v735
  %752 = vmatpush.msra.mxu0 %v734
  %753 = vmatpush.msra.mxu0 %v733
  %754 = vmatpush.msra.mxu0 %v732
  %755 = vmatpush.msra.mxu0 %v731
  %756 = vmatpush.msra.mxu0 %v730
  %757 = vmatpush.msra.mxu0 %v729
  %758 = vmatpush.msra.mxu0 %v728
  %759 = vmatpush.msra.mxu0 %v727
  %760 = vmatpush.msra.mxu0 %v726
  %761 = vmatmul.f32.gmra.mxu0 %v742
  %v762 = vpop.f32.mrf.mxu0
  %v763 = vadd.f32 %v744, %v762
  %764 = vdwg.mxu0
  %765 = vst [vmem:[%s9] sm:$0x1] %v763
  // Predicated region
  $region38: #{critic_forward.1} parent=0 // pred_check
    _
  $region39: #{critic_forward.1} parent=0 // pred_check_branch
    %767 = sbr.rel (0) target = $region41
  $region40: #{critic_forward.1} parent=0 // pred_region
    _
  $region41: #{critic_forward.1} parent=0 // pred_fallthru
    _
  // Predicated region
  $region42: #{critic_forward.1} parent=0 // pred_check
    _
  $region43: #{critic_forward.1} parent=0 // pred_check_branch
    %769 = sbr.rel (0) target = $region45
  $region44: #{critic_forward.1} parent=0 // pred_region
    _
  $region45: #{critic_forward.1} parent=0 // pred_fallthru
    _

</llo_original>
